<compile_context>
chip_gen: v7x
topology: tpu7x:2x2x1
jax: 0.10.0
libtpu: 0.0.40
codegen_flags: <defaults>
</compile_context>

<pallas_src>
import functools
import math

import jax
import jax.numpy as jnp
from jax import lax
from jax.experimental import pallas as pl
from jax.experimental.pallas import tpu as pltpu

P_DROP = 0.1
_GOLDEN = 0x9E3779B9   # odd constant used to mix the seed into the counter
_MUR1 = 0x85EBCA6B     # murmur3 fmix32 constants
_MUR2 = 0xC2B2AE35


def _uniform24_from_counter(ctr_u32, seed_u32):
    """murmur3 fmix32 of (counter, seed) -> int32 uniform in [0, 2^24)."""
    h = ctr_u32 ^ (seed_u32 * jnp.uint32(_GOLDEN))
    h = h ^ (h >> 16)
    h = h * jnp.uint32(_MUR1)
    h = h ^ (h >> 13)
    h = h * jnp.uint32(_MUR2)
    h = h ^ (h >> 16)
    return (h >> 8).astype(jnp.int32)        # top 24 bits, non-negative int32


def _fusion_kernel(seed_ref, x_ref, m_ref, o_ref, *, inv_sqrt_head, p_drop,
                   training, rows_per_batch, tile_r, sk):
    # Compute in f32 regardless of I/O dtype (bf16 I/O halves HBM traffic; the
    # exp / sum accumulation stays in f32 for accuracy).
    x = x_ref[...].astype(jnp.float32)          # (1, tile_r, Sk)
    m = m_ref[...].astype(jnp.float32)          # (1, 1, Sk) or (1, tile_r, Sk)

    s = x * inv_sqrt_head + m                   # scale + additive mask
    s = s - jnp.max(s, axis=-1, keepdims=True)  # numerically stable softmax
    e = jnp.exp(s)
    denom = jnp.sum(e, axis=-1, keepdims=True)
    # approx reciprocal -> EUP slot (free next to the VPU/exp work); ~1e-4 rel.
    p = e * pl.reciprocal(denom, approx=True)

    if training:
        b = pl.program_id(0)
        r = pl.program_id(1)
        row_local = lax.broadcasted_iota(jnp.int32, p.shape, 1)
        col = lax.broadcasted_iota(jnp.int32, p.shape, 2)
        # Globally unique element counter: dropout pattern is independent of
        # the tiling and differs per block (no repeated masks across tiles).
        row_g = b * rows_per_batch + r * tile_r + row_local
        ctr = (row_g * sk + col).astype(jnp.uint32)
        u24 = _uniform24_from_counter(ctr, seed_ref[0].astype(jnp.uint32))
        thresh = jnp.int32(int(round(p_drop * (1 << 24))))
        keep = u24 >= thresh                    # drop with prob p_drop
        p = jnp.where(keep, p * (1.0 / (1.0 - p_drop)), 0.0)

    o_ref[...] = p.astype(o_ref.dtype)


def _pick_row_tile(num_rows, sk, itemsize, target_block_bytes=4 * 1024 * 1024):
    """Largest multiple-of-8 row tile with <= target_block_bytes per buffer."""
    if num_rows <= 8:
        return int(num_rows)
    tile = (target_block_bytes // max(1, sk * itemsize)) // 8 * 8
    return int(max(8, min(num_rows, tile)))


def fusion_forward(inputs, mask, dims, *, seed=0, training=True, p_drop=P_DROP):
    """JAX/Pallas equivalent of Fusion(dims).forward(inputs, mask)."""
    attention_head_size = int(dims[1] / dims[-1])
    inv_sqrt_head = 1.0 / math.sqrt(attention_head_size)

    B, H, Sq, Sk = inputs.shape
    R = H * Sq
    x3 = inputs.reshape(B, R, Sk)

    # NOTE: for very small Sk (< 128, like the demo's 16) the lane dim is
    # under-utilized; real attention shapes (Sk >= 128) are lane-dense.
    tile_r = _pick_row_tile(R, Sk, inputs.dtype.itemsize)
    num_r = pl.cdiv(R, tile_r)

    # Mask handling: keep it tiny when it only varies over (batch, key) — the
    # standard additive attention mask — instead of materializing a full
    # B*H*Sq*Sk copy (which would add two extra full-tensor HBM passes).
    m4 = mask.reshape((1,) * (4 - mask.ndim) + tuple(mask.shape))
    if m4.shape[1] == 1 and m4.shape[2] == 1:
        m3 = jnp.broadcast_to(m4, (B, 1, 1, Sk)).reshape(B, 1, Sk)
        m_spec = pl.BlockSpec((1, 1, Sk), lambda b, r: (b, 0, 0))
    else:
        # General mask (varies over heads / query positions): per-row stream.
        m3 = jnp.broadcast_to(m4, (B, H, Sq, Sk)).reshape(B, R, Sk)
        m_spec = pl.BlockSpec((1, tile_r, Sk), lambda b, r: (b, r, 0))

    seed_arr = jnp.asarray([seed], dtype=jnp.int32)

    kernel = functools.partial(
        _fusion_kernel,
        inv_sqrt_head=inv_sqrt_head,
        p_drop=p_drop,
        training=training,
        rows_per_batch=R,
        tile_r=tile_r,
        sk=Sk,
    )

    out3 = pl.pallas_call(
        kernel,
        out_shape=jax.ShapeDtypeStruct((B, R, Sk), inputs.dtype),
        grid=(B, num_r),
        in_specs=[
            pl.BlockSpec(memory_space=pltpu.SMEM),                  # seed scalar
            pl.BlockSpec((1, tile_r, Sk), lambda b, r: (b, r, 0)),  # x tile
            m_spec,                                                 # mask
        ],
        out_specs=pl.BlockSpec((1, tile_r, Sk), lambda b, r: (b, r, 0)),
        compiler_params=pltpu.CompilerParams(
            # Both grid axes are independent -> megacore-shardable on v7x.
            dimension_semantics=("parallel", "parallel"),
            # Tiles are sized to ~4 MiB/buffer (~16-20 MiB double-buffered),
            # well inside v7x's 64 MiB physical VMEM.
            vmem_limit_bytes=48 * 1024 * 1024,
        ),
    )(seed_arr, x3, m3)

    return out3.reshape(B, H, Sq, Sk)


def fusion_reference(inputs, mask, dims):
    """Pure-JAX reference (dropout omitted -> compare against eval mode)."""
    attention_head_size = int(dims[1] / dims[-1])
    out1 = inputs / math.sqrt(attention_head_size)
    out2 = out1 + mask
    return jax.nn.softmax(out2, axis=-1)


if __name__ == "__main__":
    key = jax.random.PRNGKey(0)
    k1, k2 = jax.random.split(key)

    # dims as the PyTorch module receives them: hidden=64, num_heads=16
    # -> attention_head_size = 64 / 16 = 4
    dims = [2, 64, 16, 16]
    B, H, Sq, Sk = 2, 4, 16, 16

    inputs = jax.random.normal(k1, (B, H, Sq, Sk), dtype=jnp.float32)
    # Additive attention mask, broadcast over heads and query positions.
    mask = jnp.where(
        jax.random.uniform(k2, (B, 1, 1, Sk)) > 0.25, 0.0, -1e9
    ).astype(jnp.float32)

    # ---- eval path (dropout disabled): check against pure-JAX reference ----
    out_eval = fusion_forward(inputs, mask, dims, seed=0, training=False)
    out_eval = jax.block_until_ready(out_eval)
    ref = fusion_reference(inputs, mask, dims)
    assert out_eval.shape == inputs.shape
    # Tolerance accounts for the approximate (EUP / bf16-fallback) reciprocal.
    assert jnp.allclose(out_eval, ref, atol=1e-2, rtol=1e-2), "eval-mode mismatch"
    assert jnp.allclose(jnp.sum(out_eval, axis=-1), 1.0, atol=2e-2), "rows must sum to ~1"

    # ---- training path (in-kernel dropout) ----
    out_train = fusion_forward(inputs, mask, dims, seed=123, training=True)
    out_train = jax.block_until_ready(out_train)
    assert out_train.shape == inputs.shape
    assert bool(jnp.all(out_train >= 0.0))
    nonmasked = out_eval > 1e-6
    dropped = (out_train == 0.0) & nonmasked
    drop_frac = float(jnp.sum(dropped) / jnp.sum(nonmasked))
    assert 0.01 < drop_frac < 0.30, f"dropout fraction looks wrong: {drop_frac}"
    # Kept values are the eval softmax rescaled by 1/(1-p).
    recon = jnp.where(out_train > 0.0, out_train * (1.0 - P_DROP), out_eval)
    assert jnp.allclose(recon, out_eval, atol=1e-2, rtol=1e-2)

    print("KERNEL_OK")
</pallas_src>

<mosaic_0001>
module attributes {stable_mosaic.version = 11 : i64} {
  func.func @_fusion_kernel(%arg0: i32, %arg1: i32, %arg2: memref<1xi32, #tpu.memory_space<smem>>, %arg3: memref<1x64x16xf32, #tpu.memory_space<vmem>>, %arg4: memref<1x1x16xf32, #tpu.memory_space<vmem>>, %arg5: memref<1x64x16xf32, #tpu.memory_space<vmem>>) attributes {dimension_semantics = [#tpu.dimension_semantics<parallel>, #tpu.dimension_semantics<parallel>], iteration_bounds = array<i64: 2, 1>, scalar_prefetch = 0 : i64, scratch_operands = 0 : i64, tpu.core_type = #tpu.core_type<tc>, window_params = [{transform_indices = @transform_0, window_bounds = array<i64: 1>}, {transform_indices = @transform_1, window_bounds = array<i64: 1, 64, 16>}, {transform_indices = @transform_2, window_bounds = array<i64: 1, 1, 16>}, {transform_indices = @transform_3, window_bounds = array<i64: 1, 64, 16>}]} {
    %c0 = arith.constant 0 : index
    %c0_0 = arith.constant 0 : index
    %c0_1 = arith.constant 0 : index
    %0 = vector.load %arg3[%c0, %c0_0, %c0_1] : memref<1x64x16xf32, #tpu.memory_space<vmem>>, vector<1x64x16xf32>
    %c0_2 = arith.constant 0 : index
    %c0_3 = arith.constant 0 : index
    %c0_4 = arith.constant 0 : index
    %1 = vector.load %arg4[%c0_2, %c0_3, %c0_4] : memref<1x1x16xf32, #tpu.memory_space<vmem>>, vector<1x1x16xf32>
    %cst = arith.constant 5.000000e-01 : f32
    %2 = vector.broadcast %cst : f32 to vector<1x64x16xf32>
    %3 = arith.mulf %0, %2 : vector<1x64x16xf32>
    %4 = vector.broadcast %1 : vector<1x1x16xf32> to vector<1x64x16xf32>
    %5 = arith.addf %3, %4 : vector<1x64x16xf32>
    %cst_5 = arith.constant dense<0xFF800000> : vector<1x64xf32>
    %6 = vector.multi_reduction <maximumf>, %5, %cst_5 [2] : vector<1x64x16xf32> to vector<1x64xf32>
    %7 = vector.shape_cast %6 : vector<1x64xf32> to vector<1x64x1xf32>
    %8 = vector.broadcast %7 : vector<1x64x1xf32> to vector<1x64x16xf32>
    %9 = arith.subf %5, %8 : vector<1x64x16xf32>
    %10 = math.exp %9 : vector<1x64x16xf32>
    %cst_6 = arith.constant dense<0.000000e+00> : vector<1x64xf32>
    %11 = vector.multi_reduction <add>, %10, %cst_6 [2] : vector<1x64x16xf32> to vector<1x64xf32>
    %12 = vector.shape_cast %11 : vector<1x64xf32> to vector<1x64x1xf32>
    %13 = tpu.reciprocal %12 {approx = true} : vector<1x64x1xf32> -> vector<1x64x1xf32>
    %14 = vector.broadcast %13 : vector<1x64x1xf32> to vector<1x64x16xf32>
    %15 = arith.mulf %10, %14 : vector<1x64x16xf32>
    %c0_7 = arith.constant 0 : index
    %c0_8 = arith.constant 0 : index
    %c0_9 = arith.constant 0 : index
    %16 = vector.load %arg5[%c0_7, %c0_8, %c0_9] : memref<1x64x16xf32, #tpu.memory_space<vmem>>, vector<1x64x16xf32>
    tpu.vector_store %arg5[%c0_7, %c0_8, %c0_9], %15 {strides = array<i32>} : memref<1x64x16xf32, #tpu.memory_space<vmem>>, vector<1x64x16xf32>,
    return
  }
  func.func @transform_0(%arg0: i32, %arg1: i32) -> i32 {
    %c0_i32 = arith.constant 0 : i32
    %c0_i32_0 = arith.constant 0 : i32
    return %c0_i32 : i32
  }
  func.func @transform_1(%arg0: i32, %arg1: i32) -> (i32, i32, i32) {
    %c0_i32 = arith.constant 0 : i32
    %c0_i32_0 = arith.constant 0 : i32
    return %arg0, %arg1, %c0_i32 : i32, i32, i32
  }
  func.func @transform_2(%arg0: i32, %arg1: i32) -> (i32, i32, i32) {
    %c0_i32 = arith.constant 0 : i32
    %c0_i32_0 = arith.constant 0 : i32
    %c0_i32_1 = arith.constant 0 : i32
    return %arg0, %c0_i32, %c0_i32_0 : i32, i32, i32
  }
  func.func @transform_3(%arg0: i32, %arg1: i32) -> (i32, i32, i32) {
    %c0_i32 = arith.constant 0 : i32
    %c0_i32_0 = arith.constant 0 : i32
    return %arg0, %arg1, %c0_i32 : i32, i32, i32
  }
}

</mosaic_0001>

<llo_original>
// kernel: tpu_custom_call.1
$region0: #{tpu_custom_call.1}
  #allocation0 [shape = 'u32[]', space=smem, size = 0x4, offset = 0x4, fixed_abs, tag = 'smem constant byte address 0x4 - core index']
  #allocation1 [shape = 'u32[144,128]{1,0:T(1,128)}', space=vmem, size = 0x12000, scoped, tag = 'internal scratch']
  #allocation2 [shape = 's32[1]{0:T(128)S(6)}', space=smem, size = 0x200, scoped, tag = 'scoped memory for tpu_custom_call.1']
  %s0 = inlined_call_operand.<no memory space> [shape: s32[1], index: 0, kind: input, shape index: {}]
  %s1 = inlined_call_operand.vmem [shape: f32[2,64,16], index: 1, kind: input, shape index: {}]
  %s2 = inlined_call_operand.vmem [shape: f32[2,1,16], index: 2, kind: input, shape index: {}]
  %s3 = inlined_call_operand.vmem [shape: f32[2,64,16], index: 3, kind: output, shape index: {}]
  %s4 = sld [smem:[#allocation0]]
  $region45: #{tpu_custom_call.1} parent=0
    _
  %s6 = ssub.s32 1, %s4
  %s7 = scalar_select 0, %s6, %s4
  %8 = sst [smem:[#allocation2]] %s0
  loop: start=0, step=1, limit=4
  $region2: #{tpu_custom_call.1} parent=0 // loop_pre_header
    _
  $region3: #{tpu_custom_call.1} parent=0 // loop_header
    %s10 = sphi 0, %s14
    %p11 = scmp.ge.s32.totalorder %s10, 4
    %s17 = sphi 0, %s29
    %s18 = sphi 0, %s25
    %s19 = sphi 0, %s17
    %s20 = sphi 0, %s18
    %s21 = sphi 0, %s19
    %s22 = sphi 0, %s20
    %s30 = sphi 0, %s30
    %s32 = sphi 0, %s30
    %s33 = sphi 0, %s32
    %s47 = sphi 0, %s33
    %s55 = sphi 0, %s57
    %s58 = sphi 0, %s55
    %s59 = sphi 0, %s58
    %s75 = sphi 0, %s59
    %s81 = sphi 0, %s83
    %s84 = sphi 0, %s81
    %s85 = sphi 0, %s84
    %s101 = sphi 0, %s85
    %s109 = sphi 0, %s111
    %s112 = sphi 0, %s109
    %s113 = sphi 0, %s112
    %s129 = sphi 0, %s113
  $region4: #{tpu_custom_call.1} parent=0 // loop_header_branch
    %13 = sbr.rel (%p11) target = $region8
  $region5: #{tpu_custom_call.1} parent=0 // loop_body
    %s15 = ssub.s32 %s10, 1
    %s16 = ssub.s32 %s10, 2
    %s23 = sadd.s32 1, %s18
    %p24 = scmp.ge.s32.totalorder %s23, 1
    %s25 = scalar_select %p24, 0, %s23
    %s26 = sadd.s32 1, %s17
    %s27 = scalar_select %p24, %s26, %s17
    %p28 = scmp.ge.s32.totalorder %s27, 2
    %s29 = scalar_select %p28, 0, %s27
    %s31 = sadd.s32 %s30, 1
    %p34 = scmp.eq.s32.totalorder %s10, 1
    %p35 = scmp.ne.s32.totalorder %s30, %s32
    %p36 = scmp.eq.s32.totalorder %s10, 0
    %p37 = por %p35, %p36
    %p38 = scmp.ne.s32.totalorder %s30, %s32
    %p39 = scmp.eq.s32.totalorder %s15, 1
    %p40 = por %p38, %p39
    %p41 = scmp.ne.s32.totalorder %s32, %s33
    %p42 = scmp.eq.s32.totalorder %s15, 0
    %p43 = por %p41, %p42
    %p44 = scmp.ne.s32.totalorder %s32, %s33
    %p45 = scmp.eq.s32.totalorder %s16, 1
    %p46 = por %p44, %p45
    %p48 = scmp.ne.s32.totalorder %s33, %s47
    %p49 = scmp.eq.s32.totalorder %s16, 0
    %p50 = por %p48, %p49
    %s51 = ssub.s32 %s17, %s29
    %s52 = ssub.s32 %s18, %s25
    %s53 = sor.u32 %s51, %s52
    %p54 = scmp.eq.s32.totalorder %s53, 0
    %s56 = sadd.s32 %s55, 1
    %s57 = scalar_select %p54, %s55, %s56
    %p60 = pneg %p54
    %p61 = scmp.eq.s32.totalorder %s10, 1
    %p62 = por %p60, %p61
    %p63 = scmp.ne.s32.totalorder %s55, %s58
    %p64 = scmp.eq.s32.totalorder %s10, 0
    %p65 = por %p63, %p64
    %p66 = scmp.ne.s32.totalorder %s55, %s58
    %p67 = scmp.eq.s32.totalorder %s15, 1
    %p68 = por %p66, %p67
    %p69 = scmp.ne.s32.totalorder %s58, %s59
    %p70 = scmp.eq.s32.totalorder %s15, 0
    %p71 = por %p69, %p70
    %p72 = scmp.ne.s32.totalorder %s58, %s59
    %p73 = scmp.eq.s32.totalorder %s16, 1
    %p74 = por %p72, %p73
    %p76 = scmp.ne.s32.totalorder %s59, %s75
    %p77 = scmp.eq.s32.totalorder %s16, 0
    %p78 = por %p76, %p77
    %s79 = ssub.s32 %s17, %s29
    %p80 = scmp.eq.s32.totalorder %s79, 0
    %s82 = sadd.s32 %s81, 1
    %s83 = scalar_select %p80, %s81, %s82
    %p86 = pneg %p80
    %p87 = scmp.eq.s32.totalorder %s10, 1
    %p88 = por %p86, %p87
    %p89 = scmp.ne.s32.totalorder %s81, %s84
    %p90 = scmp.eq.s32.totalorder %s10, 0
    %p91 = por %p89, %p90
    %p92 = scmp.ne.s32.totalorder %s81, %s84
    %p93 = scmp.eq.s32.totalorder %s15, 1
    %p94 = por %p92, %p93
    %p95 = scmp.ne.s32.totalorder %s84, %s85
    %p96 = scmp.eq.s32.totalorder %s15, 0
    %p97 = por %p95, %p96
    %p98 = scmp.ne.s32.totalorder %s84, %s85
    %p99 = scmp.eq.s32.totalorder %s16, 1
    %p100 = por %p98, %p99
    %p102 = scmp.ne.s32.totalorder %s85, %s101
    %p103 = scmp.eq.s32.totalorder %s16, 0
    %p104 = por %p102, %p103
    %s105 = ssub.s32 %s17, %s29
    %s106 = ssub.s32 %s18, %s25
    %s107 = sor.u32 %s105, %s106
    %p108 = scmp.eq.s32.totalorder %s107, 0
    %s110 = sadd.s32 %s109, 1
    %s111 = scalar_select %p108, %s109, %s110
    %p114 = pneg %p108
    %p115 = scmp.eq.s32.totalorder %s10, 1
    %p116 = por %p114, %p115
    %p117 = scmp.ne.s32.totalorder %s109, %s112
    %p118 = scmp.eq.s32.totalorder %s10, 0
    %p119 = por %p117, %p118
    %p120 = scmp.ne.s32.totalorder %s109, %s112
    %p121 = scmp.eq.s32.totalorder %s15, 1
    %p122 = por %p120, %p121
    %p123 = scmp.ne.s32.totalorder %s112, %s113
    %p124 = scmp.eq.s32.totalorder %s15, 0
    %p125 = por %p123, %p124
    %p126 = scmp.ne.s32.totalorder %s112, %s113
    %p127 = scmp.eq.s32.totalorder %s16, 1
    %p128 = por %p126, %p127
    %p130 = scmp.ne.s32.totalorder %s113, %s129
    %p131 = scmp.eq.s32.totalorder %s16, 0
    %p132 = por %p130, %p131
    %p133 = scmp.le.s32.totalorder 1, %s10
    %p134 = scmp.lt.s32.totalorder %s10, 3
    %p135 = pnand %p133, %p134
    %p136 = pneg %p135
    // Predicated region
    $region9: #{tpu_custom_call.1} parent=5 // pred_check
      _
    $region10: #{tpu_custom_call.1} parent=5 // pred_check_branch
      %138 = sbr.rel (%p135) target = $region12
    $region11: #{tpu_custom_call.1} parent=5 // pred_region
      %s139 = ssub.s32 %s10, 1
      // Predicated region
      $region13: #{tpu_custom_call.1} parent=11 // pred_check
        %p140 = pneg %p43
      $region14: #{tpu_custom_call.1} parent=11 // pred_check_branch
        %142 = sbr.rel (%p140) target = $region16
      $region15: #{tpu_custom_call.1} parent=11 // pred_region
        _
      $region16: #{tpu_custom_call.1} parent=11 // pred_fallthru
        _
    $region12: #{tpu_custom_call.1} parent=5 // pred_fallthru
      _
    %p143 = scmp.lt.s32.totalorder %s10, 2
    // Predicated region
    $region17: #{tpu_custom_call.1} parent=5 // pred_check
      %p144 = pneg %p143
    $region18: #{tpu_custom_call.1} parent=5 // pred_check_branch
      %146 = sbr.rel (%p144) target = $region20
    $region19: #{tpu_custom_call.1} parent=5 // pred_region
      // Predicated region
      $region21: #{tpu_custom_call.1} parent=19 // pred_check
        %p147 = pneg %p65
      $region22: #{tpu_custom_call.1} parent=19 // pred_check_branch
        %149 = sbr.rel (%p147) target = $region24
      $region23: #{tpu_custom_call.1} parent=19 // pred_region
        %s150 = smul.u32 8, %s18
        %p151 = scmp.lt.s32.totalorder %s17, 1
        %s152 = scalar_select %p151, %s17, 1
        %p153 = scmp.lt.s32.totalorder %s150, 7
        %s154 = scalar_select %p153, %s150, 7
        %s155 = smul.addr %s152, 8
        %s156 = sadd.s32 %s154, %s155
        %s157 = smul.addr %s156, 8
        %s158 = scalar_lea.vmem %s1, %s157
        %s159 = smul.u32 8, %s18
      $region24: #{tpu_custom_call.1} parent=19 // pred_fallthru
        _
      // Predicated region
      $region25: #{tpu_custom_call.1} parent=19 // pred_check
        %p160 = pneg %p91
      $region26: #{tpu_custom_call.1} parent=19 // pred_check_branch
        %162 = sbr.rel (%p160) target = $region28
      $region27: #{tpu_custom_call.1} parent=19 // pred_region
        %p163 = scmp.lt.s32.totalorder %s17, 1
        %s164 = scalar_select %p163, %s17, 1
        %s165 = scalar_lea.vmem %s2, %s164
      $region28: #{tpu_custom_call.1} parent=19 // pred_fallthru
        _
    $region20: #{tpu_custom_call.1} parent=5 // pred_fallthru
      _
    %p166 = scmp.le.s32.totalorder 1, %s10
    %p167 = scmp.lt.s32.totalorder %s10, 3
    %p168 = pnand %p166, %p167
    %p169 = pneg %p168
    // Predicated region
    $region29: #{tpu_custom_call.1} parent=5 // pred_check
      _
    $region30: #{tpu_custom_call.1} parent=5 // pred_check_branch
      %171 = sbr.rel (%p168) target = $region32
    $region31: #{tpu_custom_call.1} parent=5 // pred_region
      %s172 = ssub.s32 %s10, 1
      %p173 = pneg %p43
      %p174 = pneg %p40
      %s175 = smul.u32 8, %s20
      %p176 = scmp.lt.s32.totalorder %s19, 1
      %s177 = scalar_select %p176, %s19, 1
      %p178 = scmp.lt.s32.totalorder %s175, 7
      %s179 = scalar_select %p178, %s175, 7
      %s180 = smul.addr %s177, 8
      %s181 = sadd.s32 %s179, %s180
      %s182 = smul.addr %s181, 8
      %s183 = scalar_lea.vmem %s1, %s182
      %p184 = pneg %p71
      %p185 = pneg %p68
      %p186 = scmp.lt.s32.totalorder %s19, 1
      %s187 = scalar_select %p186, %s19, 1
      %s188 = scalar_lea.vmem %s2, %s187
      %p189 = pneg %p97
      %p190 = pneg %p94
      %p191 = pneg %p125
      %p192 = pneg %p122
      %s193 = smul.u32 8, %s20
      %p194 = scmp.lt.s32.totalorder %s19, 1
      %s195 = scalar_select %p194, %s19, 1
      %p196 = scmp.lt.s32.totalorder %s193, 7
      %s197 = scalar_select %p196, %s193, 7
      %s198 = smul.addr %s195, 8
      %s199 = sadd.s32 %s197, %s198
      %s200 = smul.addr %s199, 8
      %s201 = scalar_lea.vmem %s3, %s200
      %s202 = smul.u32 8, %s20
      %p203 = scmp.lt.s32.totalorder %s19, 1
      %s204 = scalar_select %p203, %s19, 1
      %p205 = scmp.lt.s32.totalorder %s202, 7
      %s206 = scalar_select %p205, %s202, 7
      %s207 = smul.addr %s204, 8
      %s208 = sadd.s32 %s206, %s207
      %s209 = smul.addr %s208, 8
      %s210 = scalar_lea.vmem %s1, %s209
      %s211 = smul.u32 8, %s20
      %p212 = scmp.lt.s32.totalorder %s19, 1
      %s213 = scalar_select %p212, %s19, 1
      %s214 = scalar_lea.vmem %s2, %s213
      %s215 = smul.u32 8, %s20
      %p216 = scmp.lt.s32.totalorder %s19, 1
      %s217 = scalar_select %p216, %s19, 1
      %p218 = scmp.lt.s32.totalorder %s215, 7
      %s219 = scalar_select %p218, %s215, 7
      %s220 = smul.addr %s217, 8
      %s221 = sadd.s32 %s219, %s220
      %s222 = smul.addr %s221, 8
      %s223 = scalar_lea.vmem %s3, %s222
      %s224 = smul.u32 8, %s20
      %v225 = vld [vmem:[%s210] sm:$0xff]
      %v226 = vld [vmem:[%s210 + $0x8] sm:$0xff]
      %v227 = vld [vmem:[%s210 + $0x10] sm:$0xff]
      %v228 = vld [vmem:[%s210 + $0x18] sm:$0xff]
      %v229 = vld [vmem:[%s210 + $0x20] sm:$0xff]
      %v230 = vld [vmem:[%s210 + $0x28] sm:$0xff]
      %v231 = vld [vmem:[%s210 + $0x30] sm:$0xff]
      %v232 = vld [vmem:[%s210 + $0x38] sm:$0xff]
      %v233 = vld [vmem:[%s214] sm:$0x1]
      %v234 = vmul.f32 %v225, 0.5
      %v235 = vmul.f32 %v226, 0.5
      %v236 = vmul.f32 %v227, 0.5
      %v237 = vmul.f32 %v228, 0.5
      %v238 = vmul.f32 %v229, 0.5
      %v239 = vmul.f32 %v230, 0.5
      %v240 = vmul.f32 %v231, 0.5
      %v241 = vmul.f32 %v232, 0.5
      %v243 = vlaneseq
      %v244 = vshrl.u32 %v243, 7
      %v245 = vsub.s32 0, %v244
      %v246 = vrot.slane %v233, %v245
      %v248 = vadd.f32 %v234, %v246
      %v249 = vadd.f32 %v235, %v246
      %v250 = vadd.f32 %v236, %v246
      %v251 = vadd.f32 %v237, %v246
      %v252 = vadd.f32 %v238, %v246
      %v253 = vadd.f32 %v239, %v246
      %v254 = vadd.f32 %v240, %v246
      %v255 = vadd.f32 %v241, %v246
      %vm256 = vcmask 130048
      %v257 = vsel %vm256, %v248, -inf
      %258 = vmax.xlane.f32.xlu0 %v257
      %v259 = vpop.xlane.xlu0 %258
      %v260 = vsel %vm256, %v249, -inf
      %261 = vmax.xlane.f32.xlu0 %v260
      %v262 = vpop.xlane.xlu0 %261
      %v263 = vsel %vm256, %v250, -inf
      %264 = vmax.xlane.f32.xlu0 %v263
      %v265 = vpop.xlane.xlu0 %264
      %v266 = vsel %vm256, %v251, -inf
      %267 = vmax.xlane.f32.xlu0 %v266
      %v268 = vpop.xlane.xlu0 %267
      %v269 = vsel %vm256, %v252, -inf
      %270 = vmax.xlane.f32.xlu0 %v269
      %v271 = vpop.xlane.xlu0 %270
      %v272 = vsel %vm256, %v253, -inf
      %273 = vmax.xlane.f32.xlu0 %v272
      %v274 = vpop.xlane.xlu0 %273
      %v275 = vsel %vm256, %v254, -inf
      %276 = vmax.xlane.f32.xlu0 %v275
      %v277 = vpop.xlane.xlu0 %276
      %v278 = vsel %vm256, %v255, -inf
      %279 = vmax.xlane.f32.xlu0 %v278
      %v280 = vpop.xlane.xlu0 %279
      %v281 = vsub.f32 %v248, %v259
      %v282 = vsub.f32 %v249, %v262
      %v283 = vsub.f32 %v250, %v265
      %v284 = vsub.f32 %v251, %v268
      %v285 = vsub.f32 %v252, %v271
      %v286 = vsub.f32 %v253, %v274
      %v287 = vsub.f32 %v254, %v277
      %v288 = vsub.f32 %v255, %v280
      %v289 = vmul.f32 %v281, 1.442695
      %v290 = vpow.pop %v289
      %v291 = vmul.f32 %v282, 1.442695
      %v292 = vpow.pop %v291
      %v293 = vmul.f32 %v283, 1.442695
      %v294 = vpow.pop %v293
      %v295 = vmul.f32 %v284, 1.442695
      %v296 = vpow.pop %v295
      %v297 = vmul.f32 %v285, 1.442695
      %v298 = vpow.pop %v297
      %v299 = vmul.f32 %v286, 1.442695
      %v300 = vpow.pop %v299
      %v301 = vmul.f32 %v287, 1.442695
      %v302 = vpow.pop %v301
      %v303 = vmul.f32 %v288, 1.442695
      %v304 = vpow.pop %v303
      %v305 = vsel %vm256, %v290, 0.0
      %306 = vadd.xlane.f32.xlu0 %v305
      %v307 = vpop.xlane.xlu0 %306
      %v308 = vsel %vm256, %v292, 0.0
      %309 = vadd.xlane.f32.xlu0 %v308
      %v310 = vpop.xlane.xlu0 %309
      %v311 = vsel %vm256, %v294, 0.0
      %312 = vadd.xlane.f32.xlu0 %v311
      %v313 = vpop.xlane.xlu0 %312
      %v314 = vsel %vm256, %v296, 0.0
      %315 = vadd.xlane.f32.xlu0 %v314
      %v316 = vpop.xlane.xlu0 %315
      %v317 = vsel %vm256, %v298, 0.0
      %318 = vadd.xlane.f32.xlu0 %v317
      %v319 = vpop.xlane.xlu0 %318
      %v320 = vsel %vm256, %v300, 0.0
      %321 = vadd.xlane.f32.xlu0 %v320
      %v322 = vpop.xlane.xlu0 %321
      %v323 = vsel %vm256, %v302, 0.0
      %324 = vadd.xlane.f32.xlu0 %v323
      %v325 = vpop.xlane.xlu0 %324
      %v326 = vsel %vm256, %v304, 0.0
      %327 = vadd.xlane.f32.xlu0 %v326
      %v328 = vpop.xlane.xlu0 %327
      %v329 = vrcp.pop %v307
      %v330 = vrcp.pop %v310
      %v331 = vrcp.pop %v313
      %v332 = vrcp.pop %v316
      %v333 = vrcp.pop %v319
      %v334 = vrcp.pop %v322
      %v335 = vrcp.pop %v325
      %v336 = vrcp.pop %v328
      %v337 = vmul.f32 %v290, %v329
      %v338 = vmul.f32 %v292, %v330
      %v339 = vmul.f32 %v294, %v331
      %v340 = vmul.f32 %v296, %v332
      %v341 = vmul.f32 %v298, %v333
      %v342 = vmul.f32 %v300, %v334
      %v343 = vmul.f32 %v302, %v335
      %v344 = vmul.f32 %v304, %v336
      %345 = vst.msk [vmem:[%s223] sm:$0xff] %vm256, %v337
      %346 = vst.msk [vmem:[%s223 + $0x8] sm:$0xff] %vm256, %v338
      %347 = vst.msk [vmem:[%s223 + $0x10] sm:$0xff] %vm256, %v339
      %348 = vst.msk [vmem:[%s223 + $0x18] sm:$0xff] %vm256, %v340
      %349 = vst.msk [vmem:[%s223 + $0x20] sm:$0xff] %vm256, %v341
      %350 = vst.msk [vmem:[%s223 + $0x28] sm:$0xff] %vm256, %v342
      %351 = vst.msk [vmem:[%s223 + $0x30] sm:$0xff] %vm256, %v343
      %352 = vst.msk [vmem:[%s223 + $0x38] sm:$0xff] %vm256, %v344
      %s353 = smul.u32 8, %s20
      %p354 = scmp.lt.s32.totalorder %s19, 1
      %s355 = scalar_select %p354, %s19, 1
      %p356 = scmp.lt.s32.totalorder %s353, 7
      %s357 = scalar_select %p356, %s353, 7
      %s358 = smul.addr %s355, 8
      %s359 = sadd.s32 %s357, %s358
      %s360 = smul.addr %s359, 8
      %s361 = scalar_lea.vmem %s3, %s360
      // Predicated region
      $region33: #{tpu_custom_call.1} parent=31 // pred_check
        %p362 = pneg %p122
      $region34: #{tpu_custom_call.1} parent=31 // pred_check_branch
        %364 = sbr.rel (%p362) target = $region36
      $region35: #{tpu_custom_call.1} parent=31 // pred_region
        %s365 = smul.u32 8, %s20
      $region36: #{tpu_custom_call.1} parent=31 // pred_fallthru
        _
    $region32: #{tpu_custom_call.1} parent=5 // pred_fallthru
      _
    %p366 = scmp.le.s32.totalorder 2, %s10
    // Predicated region
    $region37: #{tpu_custom_call.1} parent=5 // pred_check
      %p367 = pneg %p366
    $region38: #{tpu_custom_call.1} parent=5 // pred_check_branch
      %369 = sbr.rel (%p367) target = $region40
    $region39: #{tpu_custom_call.1} parent=5 // pred_region
      %s370 = ssub.s32 %s10, 2
      // Predicated region
      $region41: #{tpu_custom_call.1} parent=39 // pred_check
        %p371 = pneg %p128
      $region42: #{tpu_custom_call.1} parent=39 // pred_check_branch
        %373 = sbr.rel (%p371) target = $region44
      $region43: #{tpu_custom_call.1} parent=39 // pred_region
        %s374 = smul.u32 8, %s22
        %p375 = scmp.lt.s32.totalorder %s21, 1
        %s376 = scalar_select %p375, %s21, 1
        %p377 = scmp.lt.s32.totalorder %s374, 7
        %s378 = scalar_select %p377, %s374, 7
        %s379 = smul.addr %s376, 8
        %s380 = sadd.s32 %s378, %s379
        %s381 = smul.addr %s380, 8
        %s382 = scalar_lea.vmem %s3, %s381
      $region44: #{tpu_custom_call.1} parent=39 // pred_fallthru
        _
    $region40: #{tpu_custom_call.1} parent=5 // pred_fallthru
      _
  $region6: #{tpu_custom_call.1} parent=0 // loop_footer
    %s14 = sadd.s32 1, %s10
  $region7: #{tpu_custom_call.1} parent=0 // loop_footer_branch
    %9 = sbr.rel target = $region3
  $region8: #{tpu_custom_call.1} parent=0 // loop_exit
    _

</llo_original>
